<compile_context>
chip_gen: v7x
topology: tpu7x:2x2x1
jax: 0.10.0
libtpu: 0.0.40
codegen_flags: <defaults>
</compile_context>

<pallas_src>
import jax
import jax.numpy as jnp
from jax.experimental import pallas as pl
from jax.experimental.pallas import tpu as pltpu


def bert_output_kernel(x_ref, w1_ref, b1_ref, w2_ref, b2_ref, o_ref):
    # x_ref : (tm, Hp)  bf16 row-tile of the flattened input (streamed)
    # w1_ref: (Hp, Hp)  bf16 dense.weight, pre-transposed to (K, N) layout
    # b1_ref: (1, Hp)   f32  dense.bias (zero padded)
    # w2_ref: (Hp, LP)  bf16 out_proj.weight, pre-transposed to (K, N) layout
    # b2_ref: (1, LP)   f32  out_proj.bias (zero padded)
    # o_ref : (tm, LP)  lane-dense output tile (sliced to (M, L) outside)

    # dropout (eval mode) == identity
    x = x_ref[...]

    # dense: h = x @ W1 + b1  -- standard (M,K)x(K,N) contraction, no in-kernel
    # weight relayout.  bf16 operands, f32 accumulation.
    h = jnp.dot(x, w1_ref[...], preferred_element_type=jnp.float32) + b1_ref[...]
    h = jnp.tanh(h)  # f32 elementwise (EUP/VPU)

    # dropout (eval mode) == identity
    # out_proj: z = h @ W2 + b2 ; explicit bf16 cast of the f32 accumulator is
    # intentional (bf16 MXU operands, f32 accumulation).
    out = jnp.dot(h.astype(w2_ref.dtype), w2_ref[...],
                  preferred_element_type=jnp.float32) + b2_ref[...]

    o_ref[...] = out.astype(o_ref.dtype)


def _vmem_capacity_bytes():
    """Physical VMEM capacity; conservative 64 MiB (v7x) fallback."""
    try:
        return int(pltpu.get_tpu_info().vmem_capacity_bytes)
    except Exception:
        return 64 * 1024 * 1024


def _pick_row_tile(M, Hp, LP, *, cap_bytes, out_bytes=4):
    """Largest MXU-friendly row tile that fits a generation-aware VMEM budget.

    Accounts for: single-buffered resident weights/biases, double-buffered
    streamed x and out tiles, and the implicit intermediates (f32 h tile plus
    its bf16 copy).  ~40% of physical capacity is used as the budget, leaving
    headroom for compiler-internal scratch.
    """
    target = 1024 if cap_bytes >= 100 * 1024 * 1024 else 512
    budget = int(cap_bytes * 0.40)
    resident = (Hp * Hp + Hp * LP) * 2 + (Hp + LP) * 4   # Buffered(1) weights + biases

    tm = target
    while tm > 8:
        stream = 2 * tm * Hp * 2          # double-buffered bf16 x tile
        stream += 2 * tm * LP * out_bytes  # double-buffered out tile
        interm = tm * Hp * 4 + tm * Hp * 2  # f32 h + bf16 copy fed to 2nd matmul
        if resident + stream + interm <= budget:
            break
        tm //= 2

    # Don't pad tiny inputs up to a huge tile: size the tile to the data.
    if M <= tm:
        tm = max(8, ((M + 7) // 8) * 8)

    # v7x has 2 TensorCores: keep the row grid at >= 2 steps so the "parallel"
    # axis can be sharded across them.  Costs one extra ~0.35us step on 1-TC
    # chips (v5e/v6e) — negligible.
    while pl.cdiv(M, tm) < 2 and tm > 8:
        tm = max(8, tm // 2)
    return tm


def bert_output_layer(x, w1, b1, w2, b2, *, tm=None, lane=128):
    """x: [B, S, H].  w1: [H, H], b1: [H], w2: [L, H], b2: [L] (PyTorch layouts)."""
    B, S, H = x.shape
    L = w2.shape[0]
    M = B * S
    Hp = pl.cdiv(H, lane) * lane          # lane-dense hidden dim
    LP = pl.cdiv(L, lane) * lane          # lane-dense label dim

    cap = _vmem_capacity_bytes()
    out_dtype = x.dtype                   # keep f32 logits; bf16 writeback is an
                                          # optional v6e bandwidth win, skipped for precision.
    out_bytes = jnp.dtype(out_dtype).itemsize
    if tm is None:
        tm = _pick_row_tile(M, Hp, LP, cap_bytes=cap, out_bytes=out_bytes)
    Mp = pl.cdiv(M, tm) * tm              # ragged-tail handling via row padding

    # ---- operand prep (all padding/transpose done once, amortized over the grid)
    x2 = x.reshape(M, H)
    x2b = jnp.pad(x2, ((0, Mp - M), (0, Hp - H))).astype(jnp.bfloat16)

    # MXU-standard (K, N) layout: transpose the PyTorch (out, in) weights once
    # in the wrapper so the kernel contracts on the weights' FIRST dim.
    w1t = jnp.pad(w1.T, ((0, Hp - H), (0, Hp - H))).astype(jnp.bfloat16)   # (Hp, Hp)
    w2t = jnp.pad(w2.T, ((0, Hp - H), (0, LP - L))).astype(jnp.bfloat16)   # (Hp, LP)
    b1r = jnp.pad(b1, (0, Hp - H)).reshape(1, Hp).astype(jnp.float32)
    b2r = jnp.pad(b2, (0, LP - L)).reshape(1, LP).astype(jnp.float32)

    cost = pl.CostEstimate(
        flops=2 * Mp * Hp * (Hp + LP),
        transcendentals=Mp * Hp,
        bytes_accessed=(x2b.size * 2 + w1t.size * 2 + w2t.size * 2
                        + b1r.size * 4 + b2r.size * 4 + Mp * LP * out_bytes),
    )

    resident_once = pl.Buffered(1)        # constant-index blocks: DMA'd once, 1 buffer

    out2 = pl.pallas_call(
        bert_output_kernel,
        out_shape=jax.ShapeDtypeStruct((Mp, LP), out_dtype),
        grid_spec=pltpu.PrefetchScalarGridSpec(
            num_scalar_prefetch=0,
            grid=(Mp // tm,),
            in_specs=[
                pl.BlockSpec((tm, Hp), lambda i: (i, 0)),   # x row tile (streamed, double-buffered)
                pl.BlockSpec((Hp, Hp), lambda i: (0, 0), pipeline_mode=resident_once),  # W1
                pl.BlockSpec((1, Hp), lambda i: (0, 0), pipeline_mode=resident_once),   # b1
                pl.BlockSpec((Hp, LP), lambda i: (0, 0), pipeline_mode=resident_once),  # W2
                pl.BlockSpec((1, LP), lambda i: (0, 0), pipeline_mode=resident_once),   # b2
            ],
            out_specs=pl.BlockSpec((tm, LP), lambda i: (i, 0)),
        ),
        compiler_params=pltpu.CompilerParams(
            dimension_semantics=("parallel",),
            vmem_limit_bytes=int(cap * 0.75),   # generation-aware scoped limit
        ),
        cost_estimate=cost,
    )(x2b, w1t, b1r, w2t, b2r)

    return out2[:M, :L].reshape(B, S, L)


if __name__ == "__main__":
    # Small config consistent with the module: hidden_size=32, num_labels=8.
    B, S, H, L = 2, 8, 32, 8

    key = jax.random.PRNGKey(0)
    kx, kw1, kb1, kw2, kb2 = jax.random.split(key, 5)

    x = jax.random.normal(kx, (B, S, H), dtype=jnp.float32)
    # Deterministic "init" of the nn.Linear parameters (PyTorch shapes).
    w1 = jax.random.normal(kw1, (H, H), dtype=jnp.float32) * 0.05   # dense.weight
    b1 = jax.random.normal(kb1, (H,), dtype=jnp.float32) * 0.05     # dense.bias
    w2 = jax.random.normal(kw2, (L, H), dtype=jnp.float32) * 0.05   # out_proj.weight
    b2 = jax.random.normal(kb2, (L,), dtype=jnp.float32) * 0.05     # out_proj.bias

    fn = jax.jit(bert_output_layer)
    out = jax.block_until_ready(fn(x, w1, b1, w2, b2))

    # Pure-JAX f32 reference (dropout == identity in eval mode). Tolerance is
    # widened because the kernel intentionally uses bf16 MXU operands.
    ref = jnp.tanh(x @ w1.T + b1) @ w2.T + b2
    assert out.shape == (B, S, L)
    assert jnp.allclose(out, ref, atol=2e-2, rtol=2e-2), (
        float(jnp.max(jnp.abs(out - ref))))

    print("KERNEL_OK")
</pallas_src>

<mosaic_0001>
module attributes {stable_mosaic.version = 11 : i64} {
  func.func @bert_output_kernel(%arg0: i32, %arg1: memref<8x128xbf16, #tpu.memory_space<vmem>>, %arg2: memref<128x128xbf16, #tpu.memory_space<vmem>>, %arg3: memref<1x128xf32, #tpu.memory_space<vmem>>, %arg4: memref<128x128xbf16, #tpu.memory_space<vmem>>, %arg5: memref<1x128xf32, #tpu.memory_space<vmem>>, %arg6: memref<8x128xf32, #tpu.memory_space<vmem>>) attributes {dimension_semantics = [#tpu.dimension_semantics<parallel>], iteration_bounds = array<i64: 2>, scalar_prefetch = 0 : i64, scratch_operands = 0 : i64, tpu.core_type = #tpu.core_type<tc>, window_params = [{transform_indices = @transform_0, window_bounds = array<i64: 8, 128>}, {pipeline_mode = #tpu.pipeline_mode<synchronous>, transform_indices = @transform_1, window_bounds = array<i64: 128, 128>}, {pipeline_mode = #tpu.pipeline_mode<synchronous>, transform_indices = @transform_2, window_bounds = array<i64: 1, 128>}, {pipeline_mode = #tpu.pipeline_mode<synchronous>, transform_indices = @transform_3, window_bounds = array<i64: 128, 128>}, {pipeline_mode = #tpu.pipeline_mode<synchronous>, transform_indices = @transform_4, window_bounds = array<i64: 1, 128>}, {transform_indices = @transform_5, window_bounds = array<i64: 8, 128>}]} {
    %c0 = arith.constant 0 : index
    %c0_0 = arith.constant 0 : index
    %0 = vector.load %arg1[%c0, %c0_0] : memref<8x128xbf16, #tpu.memory_space<vmem>>, vector<8x128xbf16>
    %c0_1 = arith.constant 0 : index
    %c0_2 = arith.constant 0 : index
    %1 = vector.load %arg2[%c0_1, %c0_2] : memref<128x128xbf16, #tpu.memory_space<vmem>>, vector<128x128xbf16>
    %cst = arith.constant dense<0.000000e+00> : vector<8x128xf32>
    %2 = tpu.matmul %0, %1, %cst {dimension_numbers = #tpu.dot_dimension_numbers<[1], [0], [0], [1], [0, 0, 1, 1], [], []>} : vector<8x128xbf16>, vector<128x128xbf16>, vector<8x128xf32> -> vector<8x128xf32>
    %c0_3 = arith.constant 0 : index
    %c0_4 = arith.constant 0 : index
    %3 = vector.load %arg3[%c0_3, %c0_4] : memref<1x128xf32, #tpu.memory_space<vmem>>, vector<1x128xf32>
    %4 = vector.broadcast %3 : vector<1x128xf32> to vector<8x128xf32>
    %5 = arith.addf %2, %4 : vector<8x128xf32>
    %6 = math.tanh %5 : vector<8x128xf32>
    %7 = arith.truncf %6 : vector<8x128xf32> to vector<8x128xbf16>
    %c0_5 = arith.constant 0 : index
    %c0_6 = arith.constant 0 : index
    %8 = vector.load %arg4[%c0_5, %c0_6] : memref<128x128xbf16, #tpu.memory_space<vmem>>, vector<128x128xbf16>
    %cst_7 = arith.constant dense<0.000000e+00> : vector<8x128xf32>
    %9 = tpu.matmul %7, %8, %cst_7 {dimension_numbers = #tpu.dot_dimension_numbers<[1], [0], [0], [1], [0, 0, 1, 1], [], []>} : vector<8x128xbf16>, vector<128x128xbf16>, vector<8x128xf32> -> vector<8x128xf32>
    %c0_8 = arith.constant 0 : index
    %c0_9 = arith.constant 0 : index
    %10 = vector.load %arg5[%c0_8, %c0_9] : memref<1x128xf32, #tpu.memory_space<vmem>>, vector<1x128xf32>
    %11 = vector.broadcast %10 : vector<1x128xf32> to vector<8x128xf32>
    %12 = arith.addf %9, %11 : vector<8x128xf32>
    %c0_10 = arith.constant 0 : index
    %c0_11 = arith.constant 0 : index
    %13 = vector.load %arg6[%c0_10, %c0_11] : memref<8x128xf32, #tpu.memory_space<vmem>>, vector<8x128xf32>
    tpu.vector_store %arg6[%c0_10, %c0_11], %12 {strides = array<i32>} : memref<8x128xf32, #tpu.memory_space<vmem>>, vector<8x128xf32>,
    return
  }
  func.func @transform_0(%arg0: i32) -> (i32, i32) {
    %c0_i32 = arith.constant 0 : i32
    %c0_i32_0 = arith.constant 0 : i32
    return %arg0, %c0_i32 : i32, i32
  }
  func.func @transform_1(%arg0: i32) -> (i32, i32) {
    %c0_i32 = arith.constant 0 : i32
    %c0_i32_0 = arith.constant 0 : i32
    %c0_i32_1 = arith.constant 0 : i32
    return %c0_i32, %c0_i32_0 : i32, i32
  }
  func.func @transform_2(%arg0: i32) -> (i32, i32) {
    %c0_i32 = arith.constant 0 : i32
    %c0_i32_0 = arith.constant 0 : i32
    %c0_i32_1 = arith.constant 0 : i32
    return %c0_i32, %c0_i32_0 : i32, i32
  }
  func.func @transform_3(%arg0: i32) -> (i32, i32) {
    %c0_i32 = arith.constant 0 : i32
    %c0_i32_0 = arith.constant 0 : i32
    %c0_i32_1 = arith.constant 0 : i32
    return %c0_i32, %c0_i32_0 : i32, i32
  }
  func.func @transform_4(%arg0: i32) -> (i32, i32) {
    %c0_i32 = arith.constant 0 : i32
    %c0_i32_0 = arith.constant 0 : i32
    %c0_i32_1 = arith.constant 0 : i32
    return %c0_i32, %c0_i32_0 : i32, i32
  }
  func.func @transform_5(%arg0: i32) -> (i32, i32) {
    %c0_i32 = arith.constant 0 : i32
    %c0_i32_0 = arith.constant 0 : i32
    return %arg0, %c0_i32 : i32, i32
  }
}

</mosaic_0001>

<llo_original>
// kernel: bert_output_layer.1
$region0: #{bert_output_layer.1}
  #allocation0 [shape = 'u32[]', space=smem, size = 0x4, offset = 0x4, fixed_abs, tag = 'smem constant byte address 0x4 - core index']
  #allocation1 [shape = 'u32[144,128]{1,0:T(1,128)}', space=vmem, size = 0x12000, scoped, tag = 'internal scratch']
  %s0 = inlined_call_operand.vmem [shape: bf16[16,128], index: 0, kind: input, shape index: {}]
  %s1 = inlined_call_operand.vmem [shape: bf16[128,128], index: 1, kind: input, shape index: {}]
  %s2 = inlined_call_operand.vmem [shape: f32[1,128], index: 2, kind: input, shape index: {}]
  %s3 = inlined_call_operand.vmem [shape: bf16[128,128], index: 3, kind: input, shape index: {}]
  %s4 = inlined_call_operand.vmem [shape: f32[1,128], index: 4, kind: input, shape index: {}]
  %s5 = inlined_call_operand.vmem [shape: f32[16,128], index: 5, kind: output, shape index: {}]
  %s6 = sld [smem:[#allocation0]]
  $region53: #{bert_output_layer.1} parent=0
    _
  %s8 = ssub.s32 1, %s6
  %s9 = scalar_select 0, %s8, %s6
  loop: start=0, step=1, limit=4
  $region2: #{bert_output_layer.1} parent=0 // loop_pre_header
    _
  $region3: #{bert_output_layer.1} parent=0 // loop_header
    %s11 = sphi 0, %s15
    %p12 = scmp.ge.s32.totalorder %s11, 4
    %s21 = sphi 0, %s23
    %s24 = sphi 0, %s21
    %s25 = sphi 0, %s24
    %s41 = sphi 0, %s25
    %s45 = sphi 0, %s45
    %s47 = sphi 0, %s45
    %s48 = sphi 0, %s47
    %s62 = sphi 0, %s48
    %s66 = sphi 0, %s66
    %s68 = sphi 0, %s66
    %s69 = sphi 0, %s68
    %s83 = sphi 0, %s69
    %s87 = sphi 0, %s87
    %s89 = sphi 0, %s87
    %s90 = sphi 0, %s89
    %s104 = sphi 0, %s90
    %s108 = sphi 0, %s108
    %s110 = sphi 0, %s108
    %s111 = sphi 0, %s110
    %s125 = sphi 0, %s111
    %s131 = sphi 0, %s133
    %s134 = sphi 0, %s131
    %s135 = sphi 0, %s134
    %s151 = sphi 0, %s135
  $region4: #{bert_output_layer.1} parent=0 // loop_header_branch
    %14 = sbr.rel (%p12) target = $region8
  $region5: #{bert_output_layer.1} parent=0 // loop_body
    %s16 = ssub.s32 %s11, 1
    %s17 = ssub.s32 %s11, 2
    %s18 = sadd.s32 %s11, 1
    %s19 = ssub.s32 %s11, %s18
    %p20 = scmp.eq.s32.totalorder %s19, 0
    %s22 = sadd.s32 %s21, 1
    %s23 = scalar_select %p20, %s21, %s22
    %p26 = pneg %p20
    %p27 = scmp.eq.s32.totalorder %s11, 1
    %p28 = por %p26, %p27
    %p29 = scmp.ne.s32.totalorder %s21, %s24
    %p30 = scmp.eq.s32.totalorder %s11, 0
    %p31 = por %p29, %p30
    %p32 = scmp.ne.s32.totalorder %s21, %s24
    %p33 = scmp.eq.s32.totalorder %s16, 1
    %p34 = por %p32, %p33
    %p35 = scmp.ne.s32.totalorder %s24, %s25
    %p36 = scmp.eq.s32.totalorder %s16, 0
    %p37 = por %p35, %p36
    %p38 = scmp.ne.s32.totalorder %s24, %s25
    %p39 = scmp.eq.s32.totalorder %s17, 1
    %p40 = por %p38, %p39
    %p42 = scmp.ne.s32.totalorder %s25, %s41
    %p43 = scmp.eq.s32.totalorder %s17, 0
    %p44 = por %p42, %p43
    %s46 = sadd.s32 %s45, 1
    %p49 = scmp.eq.s32.totalorder %s11, 1
    %p50 = scmp.ne.s32.totalorder %s45, %s47
    %p51 = scmp.eq.s32.totalorder %s11, 0
    %p52 = por %p50, %p51
    %p53 = scmp.ne.s32.totalorder %s45, %s47
    %p54 = scmp.eq.s32.totalorder %s16, 1
    %p55 = por %p53, %p54
    %p56 = scmp.ne.s32.totalorder %s47, %s48
    %p57 = scmp.eq.s32.totalorder %s16, 0
    %p58 = por %p56, %p57
    %p59 = scmp.ne.s32.totalorder %s47, %s48
    %p60 = scmp.eq.s32.totalorder %s17, 1
    %p61 = por %p59, %p60
    %p63 = scmp.ne.s32.totalorder %s48, %s62
    %p64 = scmp.eq.s32.totalorder %s17, 0
    %p65 = por %p63, %p64
    %s67 = sadd.s32 %s66, 1
    %p70 = scmp.eq.s32.totalorder %s11, 1
    %p71 = scmp.ne.s32.totalorder %s66, %s68
    %p72 = scmp.eq.s32.totalorder %s11, 0
    %p73 = por %p71, %p72
    %p74 = scmp.ne.s32.totalorder %s66, %s68
    %p75 = scmp.eq.s32.totalorder %s16, 1
    %p76 = por %p74, %p75
    %p77 = scmp.ne.s32.totalorder %s68, %s69
    %p78 = scmp.eq.s32.totalorder %s16, 0
    %p79 = por %p77, %p78
    %p80 = scmp.ne.s32.totalorder %s68, %s69
    %p81 = scmp.eq.s32.totalorder %s17, 1
    %p82 = por %p80, %p81
    %p84 = scmp.ne.s32.totalorder %s69, %s83
    %p85 = scmp.eq.s32.totalorder %s17, 0
    %p86 = por %p84, %p85
    %s88 = sadd.s32 %s87, 1
    %p91 = scmp.eq.s32.totalorder %s11, 1
    %p92 = scmp.ne.s32.totalorder %s87, %s89
    %p93 = scmp.eq.s32.totalorder %s11, 0
    %p94 = por %p92, %p93
    %p95 = scmp.ne.s32.totalorder %s87, %s89
    %p96 = scmp.eq.s32.totalorder %s16, 1
    %p97 = por %p95, %p96
    %p98 = scmp.ne.s32.totalorder %s89, %s90
    %p99 = scmp.eq.s32.totalorder %s16, 0
    %p100 = por %p98, %p99
    %p101 = scmp.ne.s32.totalorder %s89, %s90
    %p102 = scmp.eq.s32.totalorder %s17, 1
    %p103 = por %p101, %p102
    %p105 = scmp.ne.s32.totalorder %s90, %s104
    %p106 = scmp.eq.s32.totalorder %s17, 0
    %p107 = por %p105, %p106
    %s109 = sadd.s32 %s108, 1
    %p112 = scmp.eq.s32.totalorder %s11, 1
    %p113 = scmp.ne.s32.totalorder %s108, %s110
    %p114 = scmp.eq.s32.totalorder %s11, 0
    %p115 = por %p113, %p114
    %p116 = scmp.ne.s32.totalorder %s108, %s110
    %p117 = scmp.eq.s32.totalorder %s16, 1
    %p118 = por %p116, %p117
    %p119 = scmp.ne.s32.totalorder %s110, %s111
    %p120 = scmp.eq.s32.totalorder %s16, 0
    %p121 = por %p119, %p120
    %p122 = scmp.ne.s32.totalorder %s110, %s111
    %p123 = scmp.eq.s32.totalorder %s17, 1
    %p124 = por %p122, %p123
    %p126 = scmp.ne.s32.totalorder %s111, %s125
    %p127 = scmp.eq.s32.totalorder %s17, 0
    %p128 = por %p126, %p127
    %s129 = ssub.s32 %s11, %s18
    %p130 = scmp.eq.s32.totalorder %s129, 0
    %s132 = sadd.s32 %s131, 1
    %s133 = scalar_select %p130, %s131, %s132
    %p136 = pneg %p130
    %p137 = scmp.eq.s32.totalorder %s11, 1
    %p138 = por %p136, %p137
    %p139 = scmp.ne.s32.totalorder %s131, %s134
    %p140 = scmp.eq.s32.totalorder %s11, 0
    %p141 = por %p139, %p140
    %p142 = scmp.ne.s32.totalorder %s131, %s134
    %p143 = scmp.eq.s32.totalorder %s16, 1
    %p144 = por %p142, %p143
    %p145 = scmp.ne.s32.totalorder %s134, %s135
    %p146 = scmp.eq.s32.totalorder %s16, 0
    %p147 = por %p145, %p146
    %p148 = scmp.ne.s32.totalorder %s134, %s135
    %p149 = scmp.eq.s32.totalorder %s17, 1
    %p150 = por %p148, %p149
    %p152 = scmp.ne.s32.totalorder %s135, %s151
    %p153 = scmp.eq.s32.totalorder %s17, 0
    %p154 = por %p152, %p153
    %p155 = scmp.le.s32.totalorder 1, %s11
    %p156 = scmp.lt.s32.totalorder %s11, 3
    %p157 = pnand %p155, %p156
    %p158 = pneg %p157
    // Predicated region
    $region9: #{bert_output_layer.1} parent=5 // pred_check
      _
    $region10: #{bert_output_layer.1} parent=5 // pred_check_branch
      %160 = sbr.rel (%p157) target = $region12
    $region11: #{bert_output_layer.1} parent=5 // pred_region
      %s161 = ssub.s32 %s11, 1
      // Predicated region
      $region13: #{bert_output_layer.1} parent=11 // pred_check
        %p162 = pneg %p58
      $region14: #{bert_output_layer.1} parent=11 // pred_check_branch
        %164 = sbr.rel (%p162) target = $region16
      $region15: #{bert_output_layer.1} parent=11 // pred_region
        _
      $region16: #{bert_output_layer.1} parent=11 // pred_fallthru
        _
      // Predicated region
      $region17: #{bert_output_layer.1} parent=11 // pred_check
        %p165 = pneg %p79
      $region18: #{bert_output_layer.1} parent=11 // pred_check_branch
        %167 = sbr.rel (%p165) target = $region20
      $region19: #{bert_output_layer.1} parent=11 // pred_region
        _
      $region20: #{bert_output_layer.1} parent=11 // pred_fallthru
        _
      // Predicated region
      $region21: #{bert_output_layer.1} parent=11 // pred_check
        %p168 = pneg %p100
      $region22: #{bert_output_layer.1} parent=11 // pred_check_branch
        %170 = sbr.rel (%p168) target = $region24
      $region23: #{bert_output_layer.1} parent=11 // pred_region
        _
      $region24: #{bert_output_layer.1} parent=11 // pred_fallthru
        _
      // Predicated region
      $region25: #{bert_output_layer.1} parent=11 // pred_check
        %p171 = pneg %p121
      $region26: #{bert_output_layer.1} parent=11 // pred_check_branch
        %173 = sbr.rel (%p171) target = $region28
      $region27: #{bert_output_layer.1} parent=11 // pred_region
        _
      $region28: #{bert_output_layer.1} parent=11 // pred_fallthru
        _
    $region12: #{bert_output_layer.1} parent=5 // pred_fallthru
      _
    %p174 = scmp.lt.s32.totalorder %s11, 2
    // Predicated region
    $region29: #{bert_output_layer.1} parent=5 // pred_check
      %p175 = pneg %p174
    $region30: #{bert_output_layer.1} parent=5 // pred_check_branch
      %177 = sbr.rel (%p175) target = $region32
    $region31: #{bert_output_layer.1} parent=5 // pred_region
      // Predicated region
      $region33: #{bert_output_layer.1} parent=31 // pred_check
        %p178 = pneg %p31
      $region34: #{bert_output_layer.1} parent=31 // pred_check_branch
        %180 = sbr.rel (%p178) target = $region36
      $region35: #{bert_output_layer.1} parent=31 // pred_region
        %p181 = scmp.lt.s32.totalorder %s11, 1
        %s182 = scalar_select %p181, %s11, 1
        %s183 = smul.addr %s182, 4
        %s184 = scalar_lea.vmem %s0, %s183
      $region36: #{bert_output_layer.1} parent=31 // pred_fallthru
        _
    $region32: #{bert_output_layer.1} parent=5 // pred_fallthru
      _
    %p185 = scmp.le.s32.totalorder 1, %s11
    %p186 = scmp.lt.s32.totalorder %s11, 3
    %p187 = pnand %p185, %p186
    %p188 = pneg %p187
    // Predicated region
    $region37: #{bert_output_layer.1} parent=5 // pred_check
      _
    $region38: #{bert_output_layer.1} parent=5 // pred_check_branch
      %190 = sbr.rel (%p187) target = $region40
    $region39: #{bert_output_layer.1} parent=5 // pred_region
      %s191 = ssub.s32 %s11, 1
      %p192 = scmp.lt.s32.totalorder %s16, 1
      %s193 = scalar_select %p192, %s16, 1
      %s194 = smul.addr %s193, 4
      %s195 = scalar_lea.vmem %s0, %s194
      %p196 = pneg %p37
      %p197 = pneg %p34
      %p198 = pneg %p58
      %p199 = pneg %p55
      %p200 = pneg %p79
      %p201 = pneg %p76
      %p202 = pneg %p100
      %p203 = pneg %p97
      %p204 = pneg %p121
      %p205 = pneg %p118
      %p206 = pneg %p147
      %p207 = pneg %p144
      %p208 = scmp.lt.s32.totalorder %s16, 1
      %s209 = scalar_select %p208, %s16, 1
      %s210 = smul.addr %s209, 8
      %s211 = scalar_lea.vmem %s5, %s210
      %p212 = scmp.lt.s32.totalorder %s16, 1
      %s213 = scalar_select %p212, %s16, 1
      %s214 = smul.addr %s213, 4
      %s215 = scalar_lea.vmem %s0, %s214
      %p216 = scmp.lt.s32.totalorder %s16, 1
      %s217 = scalar_select %p216, %s16, 1
      %s218 = smul.addr %s217, 8
      %s219 = scalar_lea.vmem %s5, %s218
      %v221 = vld [vmem:[%s215] sm:$0xf]
      %v222 = vld [vmem:[%s1] sm:$0xf]
      %v223 = vld [vmem:[%s1 + $0x4] sm:$0xf]
      %v224 = vld [vmem:[%s1 + $0x8] sm:$0xf]
      %v225 = vld [vmem:[%s1 + $0xc] sm:$0xf]
      %v226 = vld [vmem:[%s1 + $0x10] sm:$0xf]
      %v227 = vld [vmem:[%s1 + $0x14] sm:$0xf]
      %v228 = vld [vmem:[%s1 + $0x18] sm:$0xf]
      %v229 = vld [vmem:[%s1 + $0x1c] sm:$0xf]
      %v230 = vld [vmem:[%s1 + $0x20] sm:$0xf]
      %v231 = vld [vmem:[%s1 + $0x24] sm:$0xf]
      %v232 = vld [vmem:[%s1 + $0x28] sm:$0xf]
      %v233 = vld [vmem:[%s1 + $0x2c] sm:$0xf]
      %v234 = vld [vmem:[%s1 + $0x30] sm:$0xf]
      %v235 = vld [vmem:[%s1 + $0x34] sm:$0xf]
      %v236 = vld [vmem:[%s1 + $0x38] sm:$0xf]
      %v237 = vld [vmem:[%s1 + $0x3c] sm:$0xf]
      %v238 = vld [vmem:[%s2] sm:$0x1]
      %v240 = vlaneseq
      %v241 = vshrl.u32 %v240, 7
      %v242 = vsub.s32 0, %v241
      %v243 = vrot.slane %v238, %v242
      %v261 = vunpack.c.l.b16 %v222
      %v262 = vunpack.c.l.b16 %v223
      %v263 = vunpack.c.l.b16 %v224
      %v264 = vunpack.c.l.b16 %v225
      %v265 = vunpack.c.l.b16 %v226
      %v266 = vunpack.c.l.b16 %v227
      %v267 = vunpack.c.l.b16 %v228
      %v268 = vunpack.c.l.b16 %v229
      %v269 = vunpack.c.l.b16 %v230
      %v270 = vunpack.c.l.b16 %v231
      %v271 = vunpack.c.l.b16 %v232
      %v272 = vunpack.c.l.b16 %v233
      %v273 = vunpack.c.l.b16 %v234
      %v274 = vunpack.c.l.b16 %v235
      %v275 = vunpack.c.l.b16 %v236
      %v276 = vunpack.c.l.b16 %v237
      %v277 = vpack.c.b16 %v262, %v261
      %v278 = vpack.c.b16 %v264, %v263
      %v279 = vpack.c.b16 %v266, %v265
      %v280 = vpack.c.b16 %v268, %v267
      %v281 = vpack.c.b16 %v270, %v269
      %v282 = vpack.c.b16 %v272, %v271
      %v283 = vpack.c.b16 %v274, %v273
      %v284 = vpack.c.b16 %v276, %v275
      %293 = vmatprep.subr.bf16.mxu0 0
      %294 = vmatpush1.bf16.msra.mxu0 %v277
      %295 = vmatprep.subr.bf16.mxu0 0
      %296 = vmatpush1.bf16.msra.mxu0 %v278
      %297 = vmatprep.subr.bf16.mxu0 0
      %298 = vmatpush1.bf16.msra.mxu0 %v279
      %299 = vmatprep.subr.bf16.mxu0 0
      %300 = vmatpush1.bf16.msra.mxu0 %v280
      %301 = vmatprep.subr.bf16.mxu0 0
      %302 = vmatpush1.bf16.msra.mxu0 %v281
      %303 = vmatprep.subr.bf16.mxu0 0
      %304 = vmatpush1.bf16.msra.mxu0 %v282
      %305 = vmatprep.subr.bf16.mxu0 0
      %306 = vmatpush1.bf16.msra.mxu0 %v283
      %307 = vmatprep.subr.bf16.mxu0 0
      %308 = vmatpush1.bf16.msra.mxu0 %v284
      %309 = vmatprep.subr.bf16.mxu0 0
      %310 = vmatpush1.bf16.msra.mxu0 0
      %311 = vmatprep.subr.bf16.mxu0 0
      %312 = vmatpush1.bf16.msra.mxu0 0
      %313 = vmatprep.subr.bf16.mxu0 0
      %314 = vmatpush1.bf16.msra.mxu0 0
      %315 = vmatprep.subr.bf16.mxu0 0
      %316 = vmatpush1.bf16.msra.mxu0 0
      %317 = vmatprep.subr.bf16.mxu0 0
      %318 = vmatpush1.bf16.msra.mxu0 0
      %319 = vmatprep.subr.bf16.mxu0 0
      %320 = vmatpush1.bf16.msra.mxu0 0
      %321 = vmatprep.subr.bf16.mxu0 0
      %322 = vmatpush1.bf16.msra.mxu0 0
      %323 = vmatprep.subr.bf16.mxu0 0
      %324 = vmatpush1.bf16.msra.mxu0 0
      %325 = vmatprep.mubr.bf16.mxu0 0
      %326 = vmatmul.mubr.bf16.gmra.mrb[0].mxu0 %v221
      %v327 = vpop.f32.mrb[0].mxu0
      %v328 = vadd.f32 %v243, %v327
      %v329 = vpop.f32.mrb[0].mxu0
      %v330 = vpop.f32.mrb[0].mxu0
      %v331 = vpop.f32.mrb[0].mxu0
      %332 = vdwg.mxu0
      %v333 = vtanh.pop %v328
      %v334 = vpack.c.bf16 %v333, %v333
      %v335 = vld [vmem:[%s3] sm:$0xf]
      %v336 = vld [vmem:[%s3 + $0x4] sm:$0xf]
      %v337 = vld [vmem:[%s3 + $0x8] sm:$0xf]
      %v338 = vld [vmem:[%s3 + $0xc] sm:$0xf]
      %v339 = vld [vmem:[%s3 + $0x10] sm:$0xf]
      %v340 = vld [vmem:[%s3 + $0x14] sm:$0xf]
      %v341 = vld [vmem:[%s3 + $0x18] sm:$0xf]
      %v342 = vld [vmem:[%s3 + $0x1c] sm:$0xf]
      %v343 = vld [vmem:[%s3 + $0x20] sm:$0xf]
      %v344 = vld [vmem:[%s3 + $0x24] sm:$0xf]
      %v345 = vld [vmem:[%s3 + $0x28] sm:$0xf]
      %v346 = vld [vmem:[%s3 + $0x2c] sm:$0xf]
      %v347 = vld [vmem:[%s3 + $0x30] sm:$0xf]
      %v348 = vld [vmem:[%s3 + $0x34] sm:$0xf]
      %v349 = vld [vmem:[%s3 + $0x38] sm:$0xf]
      %v350 = vld [vmem:[%s3 + $0x3c] sm:$0xf]
      %v351 = vld [vmem:[%s4] sm:$0x1]
      %v353 = vlaneseq
      %v354 = vshrl.u32 %v353, 7
      %v355 = vsub.s32 0, %v354
      %v356 = vrot.slane %v351, %v355
      %v374 = vunpack.c.l.b16 %v335
      %v375 = vunpack.c.l.b16 %v336
      %v376 = vunpack.c.l.b16 %v337
      %v377 = vunpack.c.l.b16 %v338
      %v378 = vunpack.c.l.b16 %v339
      %v379 = vunpack.c.l.b16 %v340
      %v380 = vunpack.c.l.b16 %v341
      %v381 = vunpack.c.l.b16 %v342
      %v382 = vunpack.c.l.b16 %v343
      %v383 = vunpack.c.l.b16 %v344
      %v384 = vunpack.c.l.b16 %v345
      %v385 = vunpack.c.l.b16 %v346
      %v386 = vunpack.c.l.b16 %v347
      %v387 = vunpack.c.l.b16 %v348
      %v388 = vunpack.c.l.b16 %v349
      %v389 = vunpack.c.l.b16 %v350
      %v390 = vpack.c.b16 %v375, %v374
      %v391 = vpack.c.b16 %v377, %v376
      %v392 = vpack.c.b16 %v379, %v378
      %v393 = vpack.c.b16 %v381, %v380
      %v394 = vpack.c.b16 %v383, %v382
      %v395 = vpack.c.b16 %v385, %v384
      %v396 = vpack.c.b16 %v387, %v386
      %v397 = vpack.c.b16 %v389, %v388
      %406 = vmatprep.subr.bf16.mxu0 0
      %407 = vmatpush1.bf16.msra.mxu0 %v390
      %408 = vmatprep.subr.bf16.mxu0 0
      %409 = vmatpush1.bf16.msra.mxu0 %v391
      %410 = vmatprep.subr.bf16.mxu0 0
      %411 = vmatpush1.bf16.msra.mxu0 %v392
      %412 = vmatprep.subr.bf16.mxu0 0
      %413 = vmatpush1.bf16.msra.mxu0 %v393
      %414 = vmatprep.subr.bf16.mxu0 0
      %415 = vmatpush1.bf16.msra.mxu0 %v394
      %416 = vmatprep.subr.bf16.mxu0 0
      %417 = vmatpush1.bf16.msra.mxu0 %v395
      %418 = vmatprep.subr.bf16.mxu0 0
      %419 = vmatpush1.bf16.msra.mxu0 %v396
      %420 = vmatprep.subr.bf16.mxu0 0
      %421 = vmatpush1.bf16.msra.mxu0 %v397
      %422 = vmatprep.subr.bf16.mxu0 0
      %423 = vmatpush1.bf16.msra.mxu0 0
      %424 = vmatprep.subr.bf16.mxu0 0
      %425 = vmatpush1.bf16.msra.mxu0 0
      %426 = vmatprep.subr.bf16.mxu0 0
      %427 = vmatpush1.bf16.msra.mxu0 0
      %428 = vmatprep.subr.bf16.mxu0 0
      %429 = vmatpush1.bf16.msra.mxu0 0
      %430 = vmatprep.subr.bf16.mxu0 0
      %431 = vmatpush1.bf16.msra.mxu0 0
      %432 = vmatprep.subr.bf16.mxu0 0
      %433 = vmatpush1.bf16.msra.mxu0 0
      %434 = vmatprep.subr.bf16.mxu0 0
      %435 = vmatpush1.bf16.msra.mxu0 0
      %436 = vmatprep.subr.bf16.mxu0 0
      %437 = vmatpush1.bf16.msra.mxu0 0
      %438 = vmatprep.mubr.bf16.mxu0 0
      %439 = vmatmul.mubr.bf16.gmra.mrb[0].mxu0 %v334
      %v440 = vpop.f32.mrb[0].mxu0
      %v441 = vadd.f32 %v356, %v440
      %v442 = vpop.f32.mrb[0].mxu0
      %v443 = vpop.f32.mrb[0].mxu0
      %v444 = vpop.f32.mrb[0].mxu0
      %445 = vdwg.mxu0
      %446 = vst [vmem:[%s219] sm:$0xff] %v441
      %p447 = scmp.lt.s32.totalorder %s16, 1
      %s448 = scalar_select %p447, %s16, 1
      %s449 = smul.addr %s448, 8
      %s450 = scalar_lea.vmem %s5, %s449
      // Predicated region
      $region41: #{bert_output_layer.1} parent=39 // pred_check
        %p451 = pneg %p144
      $region42: #{bert_output_layer.1} parent=39 // pred_check_branch
        %453 = sbr.rel (%p451) target = $region44
      $region43: #{bert_output_layer.1} parent=39 // pred_region
        _
      $region44: #{bert_output_layer.1} parent=39 // pred_fallthru
        _
    $region40: #{bert_output_layer.1} parent=5 // pred_fallthru
      _
    %p454 = scmp.le.s32.totalorder 2, %s11
    // Predicated region
    $region45: #{bert_output_layer.1} parent=5 // pred_check
      %p455 = pneg %p454
    $region46: #{bert_output_layer.1} parent=5 // pred_check_branch
      %457 = sbr.rel (%p455) target = $region48
    $region47: #{bert_output_layer.1} parent=5 // pred_region
      %s458 = ssub.s32 %s11, 2
      // Predicated region
      $region49: #{bert_output_layer.1} parent=47 // pred_check
        %p459 = pneg %p150
      $region50: #{bert_output_layer.1} parent=47 // pred_check_branch
        %461 = sbr.rel (%p459) target = $region52
      $region51: #{bert_output_layer.1} parent=47 // pred_region
        %p462 = scmp.lt.s32.totalorder %s17, 1
        %s463 = scalar_select %p462, %s17, 1
        %s464 = smul.addr %s463, 8
        %s465 = scalar_lea.vmem %s5, %s464
      $region52: #{bert_output_layer.1} parent=47 // pred_fallthru
        _
    $region48: #{bert_output_layer.1} parent=5 // pred_fallthru
      _
  $region6: #{bert_output_layer.1} parent=0 // loop_footer
    %s15 = sadd.s32 1, %s11
  $region7: #{bert_output_layer.1} parent=0 // loop_footer_branch
    %10 = sbr.rel target = $region3
  $region8: #{bert_output_layer.1} parent=0 // loop_exit
    _

</llo_original>
